<compile_context>
chip_gen: v5e
topology: v5e:2x2
jax: 0.10.0
libtpu: 0.0.40
codegen_flags: <defaults>
</compile_context>

<pallas_src>
import jax
import jax.numpy as jnp
from jax.experimental import pallas as pl
from jax.experimental.pallas import tpu as pltpu


# ----------------------------------------------------------------------------- kernel bodies

def _actnorm_body(x_ref, ss_ref, out_ref):
    # x_ref:   (1, cr, cc)    one (sample, channel-tile, spatial-tile) block (lane-dense)
    # ss_ref:  (1, 2, cr, 1)  per-(sample, channel) [scale, shift], mask pre-folded, f32
    # out_ref: (1, cr, cc)
    scale = ss_ref[:, 0]                      # (1, cr, 1) -> broadcast across lanes
    shift = ss_ref[:, 1]                      # (1, cr, 1)
    out_ref[...] = (x_ref[...].astype(jnp.float32) * scale + shift).astype(out_ref.dtype)


def _actnorm_kernel_dense(x_ref, ss_ref, out_ref):
    _actnorm_body(x_ref, ss_ref, out_ref)


def _actnorm_kernel_skip(order_ref, x_ref, ss_ref, out_ref):
    # order_ref (SMEM scalar prefetch) is only consumed by the index_maps.
    del order_ref
    _actnorm_body(x_ref, ss_ref, out_ref)


# ----------------------------------------------------------------------------- tiling policy

def _choose_tiles(B, C, HW, itemsize, *, block_budget=2 << 20, lane_cap=8192):
    """Pick (channel_tile cr, lane_tile cc).

    cc is a multiple of 128 (or the full HW), cr a multiple of 8 (or the full C), with
    cr*cc*itemsize <= ~2 MiB so double-buffered in + out (~8 MiB) plus the lane-padded
    (cr,1) scale/shift buffers (worst case a few MiB) stay well under the 32 MiB VMEM
    budget on every generation (v7x has only 64 MiB physical VMEM)."""
    cc = HW if HW <= lane_cap else lane_cap                     # lane_cap is a multiple of 128
    rows_fit = max(1, block_budget // max(1, cc * itemsize))
    cr = C if rows_fit >= C else max(8, (rows_fit // 8) * 8)
    # Guarantee >=2 grid steps for slabs big enough to benefit from DMA/compute overlap
    # (and from 2-TensorCore sharding on v7x).
    if B * pl.cdiv(C, cr) * pl.cdiv(HW, cc) < 2 and C * HW * itemsize > (1 << 20):
        if C >= 16:
            cr = max(8, ((C // 2 + 7) // 8) * 8)
        elif HW >= 256:
            cc = max(128, ((HW // 2 + 127) // 128) * 128)
    return cr, cc


# ----------------------------------------------------------------------------- pallas driver

_VMEM_LIMIT = 32 * 1024 * 1024  # explicit budget, valid on v5e / v6e / v7x


def _pallas_apply(x3, ss, order):
    """out = x * scale + shift on a (B, C, HW) slab; ss is (B, 2, C, 1) float32.

    If `order` (int32 (B,)) is given, the sample grid axis follows it (mask-skip path) and
    the output aliases x so samples the grid never visits keep their original values."""
    B, C, HW = x3.shape
    itemsize = x3.dtype.itemsize
    cr, cc = _choose_tiles(B, C, HW, itemsize)
    grid = (B, pl.cdiv(C, cr), pl.cdiv(HW, cc))

    cost = pl.CostEstimate(flops=2 * x3.size, transcendentals=0,
                           bytes_accessed=2 * x3.size * itemsize + ss.size * 4)
    out_shape = jax.ShapeDtypeStruct(x3.shape, x3.dtype)

    if order is None:
        # Dense path: every sample read+written once; all axes independent -> parallel.
        x_spec = pl.BlockSpec((1, cr, cc), lambda b, r, c: (b, r, c))
        s_spec = pl.BlockSpec((1, 2, cr, 1), lambda b, r, c: (b, 0, r, 0))
        return pl.pallas_call(
            _actnorm_kernel_dense,
            grid_spec=pltpu.PrefetchScalarGridSpec(
                num_scalar_prefetch=0, grid=grid,
                in_specs=[x_spec, s_spec], out_specs=x_spec),
            out_shape=out_shape,
            input_output_aliases={0: 0},          # write back into x's buffer (in-place)
            compiler_params=pltpu.CompilerParams(
                dimension_semantics=("parallel", "parallel", "parallel"),
                vmem_limit_bytes=_VMEM_LIMIT),
            cost_estimate=cost,
        )(x3, ss)

    # Mask-skip path: sample axis follows the scalar-prefetched `order`.
    x_spec = pl.BlockSpec((1, cr, cc), lambda b, r, c, o: (o[b], r, c))
    s_spec = pl.BlockSpec((1, 2, cr, 1), lambda b, r, c, o: (o[b], 0, r, 0))
    return pl.pallas_call(
        _actnorm_kernel_skip,
        grid_spec=pltpu.PrefetchScalarGridSpec(
            num_scalar_prefetch=1, grid=grid,
            in_specs=[x_spec, s_spec], out_specs=x_spec),
        out_shape=out_shape,
        # x3 is flat input index 1 (after the scalar-prefetch `order`).  Aliasing is required:
        # samples the grid never visits must keep their original values in the output buffer.
        input_output_aliases={1: 0},
        compiler_params=pltpu.CompilerParams(
            dimension_semantics=("parallel", "arbitrary", "arbitrary"),
            vmem_limit_bytes=_VMEM_LIMIT),
        cost_estimate=cost,
    )(order, x3, ss)


# ----------------------------------------------------------------------------- public wrapper

def masked_actnorm2d(x, mask, logdet, bias, logs, *, reverse=False,
                     use_pallas=None, skip_unmasked=True):
    """Functional MaskedActNorm2d.forward.

    x: (B,C,H,W); mask: (B,) bool; logdet: (B,) or None; bias/logs: (1,C,1,1).
    Returns (x_out, logdet_out): masked samples transformed, unmasked samples unchanged.
    """
    B, C, H, W = x.shape
    HW = H * W
    f32 = jnp.float32

    # ---- logdet: parameter-only scalar update, hoisted entirely out of the kernel ----
    logdet_out = None
    if logdet is not None:
        dlogdet = jnp.sum(logs.astype(f32)) * f32(HW)
        if reverse:
            dlogdet = -dlogdet
        ld = logdet.astype(f32)
        logdet_out = jnp.where(mask, ld + dlogdet, ld).astype(logdet.dtype)

    # ---- small-shape fallback: below ~256 KiB let XLA fuse instead of a custom call ----
    if use_pallas is None:
        use_pallas = x.size * x.dtype.itemsize >= (256 << 10)
    if not use_pallas:
        if not reverse:
            out = (x.astype(f32) + bias.astype(f32)) * jnp.exp(logs.astype(f32))
        else:
            out = x.astype(f32) * jnp.exp(-logs.astype(f32)) - bias.astype(f32)
        x_out = jnp.where(mask[:, None, None, None], out.astype(x.dtype), x)
        return x_out, logdet_out

    # ---- fold mask + parameters into per-(sample, channel) scale/shift (tiny XLA work) ----
    logs_c = logs.reshape(1, C).astype(f32)
    bias_c = bias.reshape(1, C).astype(f32)
    m_col = mask.reshape(B, 1)
    if not reverse:
        s = jnp.exp(logs_c)                                   # (1, C)
        scale_bc = jnp.where(m_col, s, f32(1.0))              # (B, C)
        shift_bc = jnp.where(m_col, bias_c * s, f32(0.0))     # (B, C)
    else:
        s = jnp.exp(-logs_c)
        scale_bc = jnp.where(m_col, s, f32(1.0))
        shift_bc = jnp.where(m_col, -bias_c, f32(0.0))
    ss = jnp.stack([scale_bc, shift_bc], axis=1)[..., None]   # (B, 2, C, 1) f32

    x3 = x.reshape(B, C, HW)

    order = None
    if skip_unmasked:
        # Compacted masked sample indices, padded with an *unmasked* (identity) sample so
        # padding steps are idempotent no-ops (their DMAs are skipped when the block index
        # repeats).  If every sample is masked, no padding slot is used.
        num_masked = jnp.sum(mask.astype(jnp.int32))
        fill = jnp.argmin(mask.astype(jnp.int32)).astype(jnp.int32)   # first unmasked (or 0)
        masked_ids = jnp.nonzero(mask, size=B, fill_value=0)[0].astype(jnp.int32)
        order = jnp.where(jnp.arange(B, dtype=jnp.int32) < num_masked, masked_ids, fill)

    if order is not None:
        try:
            out3 = _pallas_apply(x3, ss, order)
        except Exception:
            # TODO(synk): scalar-prefetch + aliasing skip path unavailable on this build;
            # dense grid is still correct, just without unmasked-sample HBM-traffic skipping.
            out3 = _pallas_apply(x3, ss, None)
    else:
        out3 = _pallas_apply(x3, ss, None)

    return out3.reshape(B, C, H, W), logdet_out


# ----------------------------------------------------------------------------- reference

def _ref_masked_actnorm2d(x, mask, logdet, bias, logs, reverse=False):
    """Pure-JAX reference mirroring the PyTorch module (inited=True)."""
    if not reverse:
        out = (x + bias) * jnp.exp(logs)
        dlogdet = jnp.sum(logs) * (x.shape[2] * x.shape[3])
    else:
        out = x * jnp.exp(-logs) - bias
        dlogdet = -jnp.sum(logs) * (x.shape[2] * x.shape[3])
    logdet_out = logdet + dlogdet
    m4 = mask[:, None, None, None]
    return jnp.where(m4, out, x), jnp.where(mask, logdet_out, logdet)


if __name__ == "__main__":
    B, C, H, W = 2, 4, 16, 16
    key = jax.random.PRNGKey(0)
    kx, kb, kl, kd = jax.random.split(key, 4)

    x = jax.random.normal(kx, (B, C, H, W), dtype=jnp.float32)
    mask = jnp.array([True, False])                       # per-sample bool mask
    logdet = jax.random.normal(kd, (B,), dtype=jnp.float32)

    # Deterministic, nonzero parameters => module is "inited" (no data-dependent init).
    bias = 0.1 * jax.random.normal(kb, (1, C, 1, 1), dtype=jnp.float32)
    logs = 0.1 * jax.random.normal(kl, (1, C, 1, 1), dtype=jnp.float32)

    # forward + reverse, both the mask-skip and dense Pallas paths
    for reverse in (False, True):
        ref_o, ref_l = _ref_masked_actnorm2d(x, mask, logdet, bias, logs, reverse=reverse)
        for skip in (True, False):
            o, l = masked_actnorm2d(x, mask, logdet, bias, logs, reverse=reverse,
                                    use_pallas=True, skip_unmasked=skip)
            o = jax.block_until_ready(o)
            l = jax.block_until_ready(l)
            assert jnp.allclose(o, ref_o, atol=1e-5, rtol=1e-5), (reverse, skip, "output")
            assert jnp.allclose(l, ref_l, atol=1e-5, rtol=1e-5), (reverse, skip, "logdet")

    # edge masks through the (default) skip path: all-masked and none-masked
    for m in (jnp.ones((B,), dtype=bool), jnp.zeros((B,), dtype=bool)):
        ref_o, ref_l = _ref_masked_actnorm2d(x, m, logdet, bias, logs, reverse=False)
        o, l = masked_actnorm2d(x, m, logdet, bias, logs, reverse=False, use_pallas=True)
        o = jax.block_until_ready(o)
        assert jnp.allclose(o, ref_o, atol=1e-5, rtol=1e-5), "edge-mask output"
        assert jnp.allclose(l, ref_l, atol=1e-5, rtol=1e-5), "edge-mask logdet"

    # small-shape auto dispatch (pure-JAX fusion path) for coverage
    o, l = masked_actnorm2d(x, mask, logdet, bias, logs, reverse=False)   # use_pallas=None
    o = jax.block_until_ready(o)
    ref_o, ref_l = _ref_masked_actnorm2d(x, mask, logdet, bias, logs, reverse=False)
    assert jnp.allclose(o, ref_o, atol=1e-5, rtol=1e-5), "fallback output"

    print("KERNEL_OK")
</pallas_src>

<mosaic_0001>
module attributes {stable_mosaic.version = 11 : i64} {
  func.func @_actnorm_kernel_skip(%arg0: i32, %arg1: i32, %arg2: i32, %arg3: memref<2xi32, #tpu.memory_space<smem>>, %arg4: memref<1x4x256xf32, #tpu.memory_space<vmem>>, %arg5: memref<1x2x4x1xf32, #tpu.memory_space<vmem>>, %arg6: memref<1x4x256xf32, #tpu.memory_space<vmem>>) attributes {dimension_semantics = [#tpu.dimension_semantics<parallel>, #tpu.dimension_semantics<arbitrary>, #tpu.dimension_semantics<arbitrary>], iteration_bounds = array<i64: 2, 1, 1>, scalar_prefetch = 1 : i64, scratch_operands = 0 : i64, tpu.core_type = #tpu.core_type<tc>, window_params = [{transform_indices = @transform_0, window_bounds = array<i64: 1, 4, 256>}, {transform_indices = @transform_1, window_bounds = array<i64: 1, 2, 4, 1>}, {transform_indices = @transform_2, window_bounds = array<i64: 1, 4, 256>}]} {
    %c0 = arith.constant 0 : index
    %c0_0 = arith.constant 0 : index
    %c0_1 = arith.constant 0 : index
    %c0_2 = arith.constant 0 : index
    %0 = vector.load %arg5[%c0, %c0_0, %c0_1, %c0_2] : memref<1x2x4x1xf32, #tpu.memory_space<vmem>>, vector<1x1x4x1xf32>
    %1 = vector.shape_cast %0 : vector<1x1x4x1xf32> to vector<1x4x1xf32>
    %c0_3 = arith.constant 0 : index
    %c1 = arith.constant 1 : index
    %c0_4 = arith.constant 0 : index
    %c0_5 = arith.constant 0 : index
    %2 = vector.load %arg5[%c0_3, %c1, %c0_4, %c0_5] : memref<1x2x4x1xf32, #tpu.memory_space<vmem>>, vector<1x1x4x1xf32>
    %3 = vector.shape_cast %2 : vector<1x1x4x1xf32> to vector<1x4x1xf32>
    %c0_6 = arith.constant 0 : index
    %c0_7 = arith.constant 0 : index
    %c0_8 = arith.constant 0 : index
    %4 = vector.load %arg4[%c0_6, %c0_7, %c0_8] : memref<1x4x256xf32, #tpu.memory_space<vmem>>, vector<1x4x256xf32>
    %5 = vector.broadcast %1 : vector<1x4x1xf32> to vector<1x4x256xf32>
    %6 = arith.mulf %4, %5 : vector<1x4x256xf32>
    %7 = vector.broadcast %3 : vector<1x4x1xf32> to vector<1x4x256xf32>
    %8 = arith.addf %6, %7 : vector<1x4x256xf32>
    %c0_9 = arith.constant 0 : index
    %c0_10 = arith.constant 0 : index
    %c0_11 = arith.constant 0 : index
    %9 = vector.load %arg6[%c0_9, %c0_10, %c0_11] : memref<1x4x256xf32, #tpu.memory_space<vmem>>, vector<1x4x256xf32>
    tpu.vector_store %arg6[%c0_9, %c0_10, %c0_11], %8 {strides = array<i32>} : memref<1x4x256xf32, #tpu.memory_space<vmem>>, vector<1x4x256xf32>,
    return
  }
  func.func @transform_0(%arg0: i32, %arg1: i32, %arg2: i32, %arg3: memref<2xi32, #tpu.memory_space<smem>>) -> (i32, i32, i32) {
    %0 = arith.index_cast %arg0 : i32 to index
    %1 = memref.load %arg3[%0] : memref<2xi32, #tpu.memory_space<smem>>
    %c0_i32 = arith.constant 0 : i32
    return %1, %arg1, %arg2 : i32, i32, i32
  }
  func.func @transform_1(%arg0: i32, %arg1: i32, %arg2: i32, %arg3: memref<2xi32, #tpu.memory_space<smem>>) -> (i32, i32, i32, i32) {
    %0 = arith.index_cast %arg0 : i32 to index
    %1 = memref.load %arg3[%0] : memref<2xi32, #tpu.memory_space<smem>>
    %c0_i32 = arith.constant 0 : i32
    %c0_i32_0 = arith.constant 0 : i32
    %c0_i32_1 = arith.constant 0 : i32
    return %1, %c0_i32, %arg1, %c0_i32_0 : i32, i32, i32, i32
  }
  func.func @transform_2(%arg0: i32, %arg1: i32, %arg2: i32, %arg3: memref<2xi32, #tpu.memory_space<smem>>) -> (i32, i32, i32) {
    %0 = arith.index_cast %arg0 : i32 to index
    %1 = memref.load %arg3[%0] : memref<2xi32, #tpu.memory_space<smem>>
    %c0_i32 = arith.constant 0 : i32
    return %1, %arg1, %arg2 : i32, i32, i32
  }
}

module attributes {stable_mosaic.version = 11 : i64} {
  func.func @_actnorm_kernel_dense(%arg0: i32, %arg1: i32, %arg2: i32, %arg3: memref<1x4x256xf32, #tpu.memory_space<vmem>>, %arg4: memref<1x2x4x1xf32, #tpu.memory_space<vmem>>, %arg5: memref<1x4x256xf32, #tpu.memory_space<vmem>>) attributes {dimension_semantics = [#tpu.dimension_semantics<parallel>, #tpu.dimension_semantics<parallel>, #tpu.dimension_semantics<parallel>], iteration_bounds = array<i64: 2, 1, 1>, scalar_prefetch = 0 : i64, scratch_operands = 0 : i64, tpu.core_type = #tpu.core_type<tc>, window_params = [{transform_indices = @transform_0, window_bounds = array<i64: 1, 4, 256>}, {transform_indices = @transform_1, window_bounds = array<i64: 1, 2, 4, 1>}, {transform_indices = @transform_2, window_bounds = array<i64: 1, 4, 256>}]} {
    %c0 = arith.constant 0 : index
    %c0_0 = arith.constant 0 : index
    %c0_1 = arith.constant 0 : index
    %c0_2 = arith.constant 0 : index
    %0 = vector.load %arg4[%c0, %c0_0, %c0_1, %c0_2] : memref<1x2x4x1xf32, #tpu.memory_space<vmem>>, vector<1x1x4x1xf32>
    %1 = vector.shape_cast %0 : vector<1x1x4x1xf32> to vector<1x4x1xf32>
    %c0_3 = arith.constant 0 : index
    %c1 = arith.constant 1 : index
    %c0_4 = arith.constant 0 : index
    %c0_5 = arith.constant 0 : index
    %2 = vector.load %arg4[%c0_3, %c1, %c0_4, %c0_5] : memref<1x2x4x1xf32, #tpu.memory_space<vmem>>, vector<1x1x4x1xf32>
    %3 = vector.shape_cast %2 : vector<1x1x4x1xf32> to vector<1x4x1xf32>
    %c0_6 = arith.constant 0 : index
    %c0_7 = arith.constant 0 : index
    %c0_8 = arith.constant 0 : index
    %4 = vector.load %arg3[%c0_6, %c0_7, %c0_8] : memref<1x4x256xf32, #tpu.memory_space<vmem>>, vector<1x4x256xf32>
    %5 = vector.broadcast %1 : vector<1x4x1xf32> to vector<1x4x256xf32>
    %6 = arith.mulf %4, %5 : vector<1x4x256xf32>
    %7 = vector.broadcast %3 : vector<1x4x1xf32> to vector<1x4x256xf32>
    %8 = arith.addf %6, %7 : vector<1x4x256xf32>
    %c0_9 = arith.constant 0 : index
    %c0_10 = arith.constant 0 : index
    %c0_11 = arith.constant 0 : index
    %9 = vector.load %arg5[%c0_9, %c0_10, %c0_11] : memref<1x4x256xf32, #tpu.memory_space<vmem>>, vector<1x4x256xf32>
    tpu.vector_store %arg5[%c0_9, %c0_10, %c0_11], %8 {strides = array<i32>} : memref<1x4x256xf32, #tpu.memory_space<vmem>>, vector<1x4x256xf32>,
    return
  }
  func.func @transform_0(%arg0: i32, %arg1: i32, %arg2: i32) -> (i32, i32, i32) {
    %c0_i32 = arith.constant 0 : i32
    return %arg0, %arg1, %arg2 : i32, i32, i32
  }
  func.func @transform_1(%arg0: i32, %arg1: i32, %arg2: i32) -> (i32, i32, i32, i32) {
    %c0_i32 = arith.constant 0 : i32
    %c0_i32_0 = arith.constant 0 : i32
    %c0_i32_1 = arith.constant 0 : i32
    return %arg0, %c0_i32, %arg1, %c0_i32_0 : i32, i32, i32, i32
  }
  func.func @transform_2(%arg0: i32, %arg1: i32, %arg2: i32) -> (i32, i32, i32) {
    %c0_i32 = arith.constant 0 : i32
    return %arg0, %arg1, %arg2 : i32, i32, i32
  }
}

</mosaic_0001>

<llo_original>
// kernel: tpu_custom_call.1
$region0: #{tpu_custom_call.1}
  #allocation0 [shape = 'u32[]', space=smem, size = 0x4, offset = 0x4, fixed_abs, tag = 'smem constant byte address 0x4 - core index']
  #allocation1 [shape = 'u32[72,128]{1,0:T(1,128)}', space=vmem, size = 0x9000, scoped, tag = 'internal scratch']
  #allocation2 [shape = 's32[1]{0}', space=sflag, size = 0x4, scoped, tag = 'scoped memory for tpu_custom_call.1']
  #allocation3 [shape = 'u8[512]{0}', space=smem, size = 0x200, scoped, tag = 'prefetched SMEM operand 0']
  %s0 = inlined_call_operand.vmem [shape: s32[2], index: 0, kind: input, shape index: {}]
  %s1 = inlined_call_operand.hbm [shape: f32[2,4,256], index: 1, kind: input, shape index: {}, may-alias: {1,3}]
  %s2 = inlined_call_operand.vmem [shape: f32[2,2,4,1], index: 2, kind: input, shape index: {}]
  %s3 = inlined_call_operand.hbm [shape: f32[2,4,256], index: 3, kind: output, shape index: {}, may-alias: {1,3}]
  %s4 = sld [smem:[#allocation0]]
  $region45: #{tpu_custom_call.1} parent=0
    _
  %s6 = ssub.s32 1, %s4
  %s7 = scalar_select 0, %s6, %s4
  %s9 = sshll.u32 %s0, 4
  %s10 = int_to_ptr.vmem [resolvable:$true] %s9
  %12 = dma.vmem_to_smem %s10, 16, [#allocation3], [#allocation2]
  %14 = dma.done [#allocation2], 16
  %15 = sfence
  $region1: #{tpu_custom_call.1} parent=0
    #allocation4 [shape = 'u8[8192]{0}', space=vmem, size = 0x2000, scoped, tag = 'input window, operand 1']
    #allocation5 [shape = 's32[2]{0}', space=sflag, size = 0x8, scoped, tag = 'scoped memory for tpu_custom_call.1']
    #allocation6 [shape = 's32[2]{0}', space=sflag, size = 0x8, scoped, tag = 'scoped memory for tpu_custom_call.1']
    #allocation7 [shape = 'u8[8192]{0}', space=vmem, size = 0x2000, scoped, tag = 'output window, operand 0']
    %16 = vsyncpa [#allocation5], 0
    %s17 = scalar_lea.sflag [#allocation5], 1
    %18 = vsyncpa %s17, 0
    %19 = vsyncpa [#allocation6], 0
    %s20 = scalar_lea.sflag [#allocation6], 1
    %21 = vsyncpa %s20, 0
    loop: start=0, step=1, limit=4
    $region2: #{tpu_custom_call.1} parent=1 // loop_pre_header
      _
    $region3: #{tpu_custom_call.1} parent=1 // loop_header
      %s23 = sphi 0, %s27
      %p24 = scmp.ge.s32.totalorder %s23, 4
      %s30 = sphi 0, %s49
      %s31 = sphi 0, %s45
      %s32 = sphi 0, %s41
      %s33 = sphi 0, %s30
      %s34 = sphi 0, %s31
      %s35 = sphi 0, %s32
      %s36 = sphi 0, %s33
      %s37 = sphi 0, %s34
      %s38 = sphi 0, %s35
      %s58 = sphi 0, %s60
      %s61 = sphi 0, %s58
      %s62 = sphi 0, %s61
      %s78 = sphi 0, %s62
      %s88 = sphi 0, %s90
      %s91 = sphi 0, %s88
      %s92 = sphi 0, %s91
      %s108 = sphi 0, %s92
      %s120 = sphi 0, %s122
      %s123 = sphi 0, %s120
      %s124 = sphi 0, %s123
      %s140 = sphi 0, %s124
    $region4: #{tpu_custom_call.1} parent=1 // loop_header_branch
      %26 = sbr.rel (%p24) target = $region8
    $region5: #{tpu_custom_call.1} parent=1 // loop_body
      %s28 = ssub.s32 %s23, 1
      %s29 = ssub.s32 %s23, 2
      %s39 = sadd.s32 1, %s32
      %p40 = scmp.ge.s32.totalorder %s39, 1
      %s41 = scalar_select %p40, 0, %s39
      %s42 = sadd.s32 1, %s31
      %s43 = scalar_select %p40, %s42, %s31
      %p44 = scmp.ge.s32.totalorder %s43, 1
      %s45 = scalar_select %p44, 0, %s43
      %s46 = sadd.s32 1, %s30
      %s47 = scalar_select %p44, %s46, %s30
      %p48 = scmp.ge.s32.totalorder %s47, 2
      %s49 = scalar_select %p48, 0, %s47
      %s50 = sld [smem:[#allocation3 + %s30]]
      %s51 = sld [smem:[#allocation3 + %s49]]
      %s52 = ssub.s32 %s50, %s51
      %s53 = ssub.s32 %s31, %s45
      %s54 = sor.u32 %s52, %s53
      %s55 = ssub.s32 %s32, %s41
      %s56 = sor.u32 %s54, %s55
      %p57 = scmp.eq.s32.totalorder %s56, 0
      %s59 = sadd.s32 %s58, 1
      %s60 = scalar_select %p57, %s58, %s59
      %p63 = pneg %p57
      %p64 = scmp.eq.s32.totalorder %s23, 1
      %p65 = por %p63, %p64
      %p66 = scmp.ne.s32.totalorder %s58, %s61
      %p67 = scmp.eq.s32.totalorder %s23, 0
      %p68 = por %p66, %p67
      %p69 = scmp.ne.s32.totalorder %s58, %s61
      %p70 = scmp.eq.s32.totalorder %s28, 1
      %p71 = por %p69, %p70
      %p72 = scmp.ne.s32.totalorder %s61, %s62
      %p73 = scmp.eq.s32.totalorder %s28, 0
      %p74 = por %p72, %p73
      %p75 = scmp.ne.s32.totalorder %s61, %s62
      %p76 = scmp.eq.s32.totalorder %s29, 1
      %p77 = por %p75, %p76
      %p79 = scmp.ne.s32.totalorder %s62, %s78
      %p80 = scmp.eq.s32.totalorder %s29, 0
      %p81 = por %p79, %p80
      %s82 = sld [smem:[#allocation3 + %s30]]
      %s83 = sld [smem:[#allocation3 + %s49]]
      %s84 = ssub.s32 %s82, %s83
      %s85 = ssub.s32 %s31, %s45
      %s86 = sor.u32 %s84, %s85
      %p87 = scmp.eq.s32.totalorder %s86, 0
      %s89 = sadd.s32 %s88, 1
      %s90 = scalar_select %p87, %s88, %s89
      %p93 = pneg %p87
      %p94 = scmp.eq.s32.totalorder %s23, 1
      %p95 = por %p93, %p94
      %p96 = scmp.ne.s32.totalorder %s88, %s91
      %p97 = scmp.eq.s32.totalorder %s23, 0
      %p98 = por %p96, %p97
      %p99 = scmp.ne.s32.totalorder %s88, %s91
      %p100 = scmp.eq.s32.totalorder %s28, 1
      %p101 = por %p99, %p100
      %p102 = scmp.ne.s32.totalorder %s91, %s92
      %p103 = scmp.eq.s32.totalorder %s28, 0
      %p104 = por %p102, %p103
      %p105 = scmp.ne.s32.totalorder %s91, %s92
      %p106 = scmp.eq.s32.totalorder %s29, 1
      %p107 = por %p105, %p106
      %p109 = scmp.ne.s32.totalorder %s92, %s108
      %p110 = scmp.eq.s32.totalorder %s29, 0
      %p111 = por %p109, %p110
      %s112 = sld [smem:[#allocation3 + %s30]]
      %s113 = sld [smem:[#allocation3 + %s49]]
      %s114 = ssub.s32 %s112, %s113
      %s115 = ssub.s32 %s31, %s45
      %s116 = sor.u32 %s114, %s115
      %s117 = ssub.s32 %s32, %s41
      %s118 = sor.u32 %s116, %s117
      %p119 = scmp.eq.s32.totalorder %s118, 0
      %s121 = sadd.s32 %s120, 1
      %s122 = scalar_select %p119, %s120, %s121
      %p125 = pneg %p119
      %p126 = scmp.eq.s32.totalorder %s23, 1
      %p127 = por %p125, %p126
      %p128 = scmp.ne.s32.totalorder %s120, %s123
      %p129 = scmp.eq.s32.totalorder %s23, 0
      %p130 = por %p128, %p129
      %p131 = scmp.ne.s32.totalorder %s120, %s123
      %p132 = scmp.eq.s32.totalorder %s28, 1
      %p133 = por %p131, %p132
      %p134 = scmp.ne.s32.totalorder %s123, %s124
      %p135 = scmp.eq.s32.totalorder %s28, 0
      %p136 = por %p134, %p135
      %p137 = scmp.ne.s32.totalorder %s123, %s124
      %p138 = scmp.eq.s32.totalorder %s29, 1
      %p139 = por %p137, %p138
      %p141 = scmp.ne.s32.totalorder %s124, %s140
      %p142 = scmp.eq.s32.totalorder %s29, 0
      %p143 = por %p141, %p142
      %p144 = scmp.le.s32.totalorder 1, %s23
      %p145 = scmp.lt.s32.totalorder %s23, 3
      %p146 = pnand %p144, %p145
      %p147 = pneg %p146
      // Predicated region
      $region9: #{tpu_custom_call.1} parent=5 // pred_check
        _
      $region10: #{tpu_custom_call.1} parent=5 // pred_check_branch
        %149 = sbr.rel (%p146) target = $region12
      $region11: #{tpu_custom_call.1} parent=5 // pred_region
        %s150 = ssub.s32 %s23, 1
      $region12: #{tpu_custom_call.1} parent=5 // pred_fallthru
        _
      %p151 = scmp.lt.s32.totalorder %s23, 2
      // Predicated region
      $region13: #{tpu_custom_call.1} parent=5 // pred_check
        %p152 = pneg %p151
      $region14: #{tpu_custom_call.1} parent=5 // pred_check_branch
        %154 = sbr.rel (%p152) target = $region16
      $region15: #{tpu_custom_call.1} parent=5 // pred_region
        // Predicated region
        $region17: #{tpu_custom_call.1} parent=15 // pred_check
          %p155 = pneg %p68
        $region18: #{tpu_custom_call.1} parent=15 // pred_check_branch
          %157 = sbr.rel (%p155) target = $region20
        $region19: #{tpu_custom_call.1} parent=15 // pred_region
          %s158 = sand.u32 %s58, 1
          %s159 = scalar_lea.sflag [#allocation5], %s158
          %s160 = sand.u32 %s58, 1
          %s161 = smul.addr %s160, 8
          %s162 = scalar_lea.vmem [#allocation4], %s161
          %s163 = sld [smem:[#allocation3 + %s30]]
          %s164 = smul.u32 2, %s32
          %166 = vsyncadd %s159, 0
          %s167 = smul.addr %s31, 2
          %s168 = sadd.s32 %s164, %s167
          %s169 = smul.addr %s163, 2
          %s170 = sadd.s32 %s168, %s169
          %s171 = smul.addr %s170, 4
          %s172 = scalar_lea.hbm %s1, %s171
          %s174 = sshll.u32 %s172, 4
          %s175 = int_to_ptr.hbm [resolvable:$true] %s174
          %s176 = sshll.u32 %s162, 4
          %s177 = int_to_ptr.vmem [resolvable:$true] %s176
          %179 = dma.hbm_to_vmem [thread:$0]  %s175, 128, %s177, %s159
        $region20: #{tpu_custom_call.1} parent=15 // pred_fallthru
          _
        // Predicated region
        $region21: #{tpu_custom_call.1} parent=15 // pred_check
          %p180 = pneg %p98
        $region22: #{tpu_custom_call.1} parent=15 // pred_check_branch
          %182 = sbr.rel (%p180) target = $region24
        $region23: #{tpu_custom_call.1} parent=15 // pred_region
          %s183 = sld [smem:[#allocation3 + %s30]]
          %p184 = scmp.lt.s32.totalorder %s183, 1
          %s185 = scalar_select %p184, %s183, 1
          %p186 = scmp.lt.s32.totalorder %s31, 0
          %s187 = scalar_select %p186, %s31, 0
          %s188 = smul.addr %s185, 2
          %s189 = sadd.s32 %s187, %s188
          %s190 = smul.addr %s189, 4
          %s191 = scalar_lea.vmem %s2, %s190
          %s192 = sld [smem:[#allocation3 + %s30]]
        $region24: #{tpu_custom_call.1} parent=15 // pred_fallthru
          _
      $region16: #{tpu_custom_call.1} parent=5 // pred_fallthru
        _
      %p193 = scmp.le.s32.totalorder 1, %s23
      %p194 = scmp.lt.s32.totalorder %s23, 3
      %p195 = pnand %p193, %p194
      %p196 = pneg %p195
      // Predicated region
      $region25: #{tpu_custom_call.1} parent=5 // pred_check
        _
      $region26: #{tpu_custom_call.1} parent=5 // pred_check_branch
        %198 = sbr.rel (%p195) target = $region28
      $region27: #{tpu_custom_call.1} parent=5 // pred_region
        %s199 = ssub.s32 %s23, 1
        %s200 = sand.u32 %s61, 1
        %s201 = scalar_lea.sflag [#allocation5], %s200
        %s202 = sand.u32 %s61, 1
        %s203 = smul.addr %s202, 8
        %s204 = scalar_lea.vmem [#allocation4], %s203
        // Predicated region
        $region29: #{tpu_custom_call.1} parent=27 // pred_check
          %p205 = pneg %p74
        $region30: #{tpu_custom_call.1} parent=27 // pred_check_branch
          %207 = sbr.rel (%p205) target = $region32
        $region31: #{tpu_custom_call.1} parent=27 // pred_region
          %209 = dma.done %s201, 128
        $region32: #{tpu_custom_call.1} parent=27 // pred_fallthru
          _
        %s210 = sand.u32 %s61, 1
        %s211 = scalar_lea.sflag [#allocation5], %s210
        %s212 = sand.u32 %s61, 1
        %s213 = smul.addr %s212, 8
        %s214 = scalar_lea.vmem [#allocation4], %s213
        %p215 = pneg %p74
        %p216 = pneg %p71
        %s217 = sld [smem:[#allocation3 + %s33]]
        %p218 = scmp.lt.s32.totalorder %s217, 1
        %s219 = scalar_select %p218, %s217, 1
        %p220 = scmp.lt.s32.totalorder %s34, 0
        %s221 = scalar_select %p220, %s34, 0
        %s222 = smul.addr %s219, 2
        %s223 = sadd.s32 %s221, %s222
        %s224 = smul.addr %s223, 4
        %s225 = scalar_lea.vmem %s2, %s224
        %p226 = pneg %p104
        %p227 = pneg %p101
        %p228 = pneg %p136
        %p229 = pneg %p133
        %s230 = sand.u32 %s123, 1
        %s231 = scalar_lea.sflag [#allocation6], %s230
        %s232 = sand.u32 %s123, 1
        %s233 = smul.addr %s232, 8
        %s234 = scalar_lea.vmem [#allocation7], %s233
        %s235 = sld [smem:[#allocation3 + %s33]]
        %s236 = smul.u32 2, %s35
        %s237 = sld [smem:[#allocation3 + %s33]]
        %p238 = scmp.lt.s32.totalorder %s237, 1
        %s239 = scalar_select %p238, %s237, 1
        %p240 = scmp.lt.s32.totalorder %s34, 0
        %s241 = scalar_select %p240, %s34, 0
        %s242 = smul.addr %s239, 2
        %s243 = sadd.s32 %s241, %s242
        %s244 = smul.addr %s243, 4
        %s245 = scalar_lea.vmem %s2, %s244
        %s246 = sld [smem:[#allocation3 + %s33]]
        %s247 = sld [smem:[#allocation3 + %s33]]
        %s248 = smul.u32 2, %s35
        %v249 = vld [vmem:[%s245] sm:$0xf]
        %s250 = scalar_lea.vmem %s245, 4
        %v251 = vld [vmem:[%s250] sm:$0xf]
        %v252 = vld [vmem:[%s204] sm:$0xff]
        %254 = vset.pattern.permute.xlu0 0
        %255 = vperm.xlu0 %254, %v249
        %v256 = vpop.permute.xlu0 %255
        %v258 = vunpack.c.l.s4 839922192
        %v259 = vunpack.c.0.s8 %v258
        %v260 = vperm.slane %v256, %v259
        %v262 = vmul.f32 %v252, %v260
        %264 = vset.pattern.permute.xlu0 0
        %265 = vperm.xlu0 %264, %v251
        %v266 = vpop.permute.xlu0 %265
        %v268 = vunpack.c.l.s4 839922192
        %v269 = vunpack.c.0.s8 %v268
        %v270 = vperm.slane %v266, %v269
        %v272 = vadd.f32 %v262, %v270
        %273 = vst [vmem:[%s234] sm:$0xff] %v272
        %s274 = sand.u32 %s123, 1
        %s275 = scalar_lea.sflag [#allocation6], %s274
        %s276 = sand.u32 %s123, 1
        %s277 = smul.addr %s276, 8
        %s278 = scalar_lea.vmem [#allocation7], %s277
        // Predicated region
        $region33: #{tpu_custom_call.1} parent=27 // pred_check
          %p279 = pneg %p133
        $region34: #{tpu_custom_call.1} parent=27 // pred_check_branch
          %281 = sbr.rel (%p279) target = $region36
        $region35: #{tpu_custom_call.1} parent=27 // pred_region
          %s282 = sld [smem:[#allocation3 + %s33]]
          %s283 = smul.u32 2, %s35
          %285 = vsyncadd %s275, 0
          %s286 = smul.addr %s34, 2
          %s287 = sadd.s32 %s283, %s286
          %s288 = smul.addr %s282, 2
          %s289 = sadd.s32 %s287, %s288
          %s290 = smul.addr %s289, 4
          %s291 = scalar_lea.hbm %s3, %s290
          %s293 = sshll.u32 %s278, 4
          %s294 = int_to_ptr.vmem [resolvable:$true] %s293
          %s295 = sshll.u32 %s291, 4
          %s296 = int_to_ptr.hbm [resolvable:$true] %s295
          %298 = dma.vmem_to_hbm [thread:$0]  %s294, 128, %s296, %s275
        $region36: #{tpu_custom_call.1} parent=27 // pred_fallthru
          _
      $region28: #{tpu_custom_call.1} parent=5 // pred_fallthru
        _
      %p299 = scmp.le.s32.totalorder 2, %s23
      // Predicated region
      $region37: #{tpu_custom_call.1} parent=5 // pred_check
        %p300 = pneg %p299
      $region38: #{tpu_custom_call.1} parent=5 // pred_check_branch
        %302 = sbr.rel (%p300) target = $region40
      $region39: #{tpu_custom_call.1} parent=5 // pred_region
        %s303 = ssub.s32 %s23, 2
        // Predicated region
        $region41: #{tpu_custom_call.1} parent=39 // pred_check
          %p304 = pneg %p139
        $region42: #{tpu_custom_call.1} parent=39 // pred_check_branch
          %306 = sbr.rel (%p304) target = $region44
        $region43: #{tpu_custom_call.1} parent=39 // pred_region
          %s307 = sand.u32 %s124, 1
          %s308 = scalar_lea.sflag [#allocation6], %s307
          %s309 = sand.u32 %s124, 1
          %s310 = smul.addr %s309, 8
          %s311 = scalar_lea.vmem [#allocation7], %s310
          %313 = dma.done %s308, 128
        $region44: #{tpu_custom_call.1} parent=39 // pred_fallthru
          _
      $region40: #{tpu_custom_call.1} parent=5 // pred_fallthru
        _
    $region6: #{tpu_custom_call.1} parent=1 // loop_footer
      %s27 = sadd.s32 1, %s23
    $region7: #{tpu_custom_call.1} parent=1 // loop_footer_branch
      %22 = sbr.rel target = $region3
    $region8: #{tpu_custom_call.1} parent=1 // loop_exit
      _
    %314 = vsyncpa [#allocation5], 1
    %s315 = scalar_lea.sflag [#allocation5], 1
    %316 = vsyncpa %s315, 1
    %317 = vsyncpa [#allocation6], 1
    %s318 = scalar_lea.sflag [#allocation6], 1
    %319 = vsyncpa %s318, 1

// kernel: tpu_custom_call.1
$region0: #{tpu_custom_call.1}
  #allocation0 [shape = 'u32[]', space=smem, size = 0x4, offset = 0x4, fixed_abs, tag = 'smem constant byte address 0x4 - core index']
  #allocation1 [shape = 'u32[72,128]{1,0:T(1,128)}', space=vmem, size = 0x9000, scoped, tag = 'internal scratch']
  %s0 = inlined_call_operand.hbm [shape: f32[2,4,256], index: 0, kind: input, shape index: {}, may-alias: {0,2}]
  %s1 = inlined_call_operand.vmem [shape: f32[2,2,4,1], index: 1, kind: input, shape index: {}]
  %s2 = inlined_call_operand.hbm [shape: f32[2,4,256], index: 2, kind: output, shape index: {}, may-alias: {0,2}]
  %s3 = sld [smem:[#allocation0]]
  $region45: #{tpu_custom_call.1} parent=0
    _
  %s5 = ssub.s32 1, %s3
  %s6 = scalar_select 0, %s5, %s3
  $region1: #{tpu_custom_call.1} parent=0
    #allocation2 [shape = 'u8[8192]{0}', space=vmem, size = 0x2000, scoped, tag = 'input window, operand 0']
    #allocation3 [shape = 's32[2]{0}', space=sflag, size = 0x8, scoped, tag = 'scoped memory for tpu_custom_call.1']
    #allocation4 [shape = 's32[2]{0}', space=sflag, size = 0x8, scoped, tag = 'scoped memory for tpu_custom_call.1']
    #allocation5 [shape = 'u8[8192]{0}', space=vmem, size = 0x2000, scoped, tag = 'output window, operand 0']
    %7 = vsyncpa [#allocation3], 0
    %s8 = scalar_lea.sflag [#allocation3], 1
    %9 = vsyncpa %s8, 0
    %10 = vsyncpa [#allocation4], 0
    %s11 = scalar_lea.sflag [#allocation4], 1
    %12 = vsyncpa %s11, 0
    loop: start=0, step=1, limit=4
    $region2: #{tpu_custom_call.1} parent=1 // loop_pre_header
      _
    $region3: #{tpu_custom_call.1} parent=1 // loop_header
      %s14 = sphi 0, %s18
      %p15 = scmp.ge.s32.totalorder %s14, 4
      %s21 = sphi 0, %s40
      %s22 = sphi 0, %s36
      %s23 = sphi 0, %s32
      %s24 = sphi 0, %s21
      %s25 = sphi 0, %s22
      %s26 = sphi 0, %s23
      %s27 = sphi 0, %s24
      %s28 = sphi 0, %s25
      %s29 = sphi 0, %s26
      %s47 = sphi 0, %s49
      %s50 = sphi 0, %s47
      %s51 = sphi 0, %s50
      %s67 = sphi 0, %s51
      %s75 = sphi 0, %s77
      %s78 = sphi 0, %s75
      %s79 = sphi 0, %s78
      %s95 = sphi 0, %s79
      %s105 = sphi 0, %s107
      %s108 = sphi 0, %s105
      %s109 = sphi 0, %s108
      %s125 = sphi 0, %s109
    $region4: #{tpu_custom_call.1} parent=1 // loop_header_branch
      %17 = sbr.rel (%p15) target = $region8
    $region5: #{tpu_custom_call.1} parent=1 // loop_body
      %s19 = ssub.s32 %s14, 1
      %s20 = ssub.s32 %s14, 2
      %s30 = sadd.s32 1, %s23
      %p31 = scmp.ge.s32.totalorder %s30, 1
      %s32 = scalar_select %p31, 0, %s30
      %s33 = sadd.s32 1, %s22
      %s34 = scalar_select %p31, %s33, %s22
      %p35 = scmp.ge.s32.totalorder %s34, 1
      %s36 = scalar_select %p35, 0, %s34
      %s37 = sadd.s32 1, %s21
      %s38 = scalar_select %p35, %s37, %s21
      %p39 = scmp.ge.s32.totalorder %s38, 2
      %s40 = scalar_select %p39, 0, %s38
      %s41 = ssub.s32 %s21, %s40
      %s42 = ssub.s32 %s22, %s36
      %s43 = sor.u32 %s41, %s42
      %s44 = ssub.s32 %s23, %s32
      %s45 = sor.u32 %s43, %s44
      %p46 = scmp.eq.s32.totalorder %s45, 0
      %s48 = sadd.s32 %s47, 1
      %s49 = scalar_select %p46, %s47, %s48
      %p52 = pneg %p46
      %p53 = scmp.eq.s32.totalorder %s14, 1
      %p54 = por %p52, %p53
      %p55 = scmp.ne.s32.totalorder %s47, %s50
      %p56 = scmp.eq.s32.totalorder %s14, 0
      %p57 = por %p55, %p56
      %p58 = scmp.ne.s32.totalorder %s47, %s50
      %p59 = scmp.eq.s32.totalorder %s19, 1
      %p60 = por %p58, %p59
      %p61 = scmp.ne.s32.totalorder %s50, %s51
      %p62 = scmp.eq.s32.totalorder %s19, 0
      %p63 = por %p61, %p62
      %p64 = scmp.ne.s32.totalorder %s50, %s51
      %p65 = scmp.eq.s32.totalorder %s20, 1
      %p66 = por %p64, %p65
      %p68 = scmp.ne.s32.totalorder %s51, %s67
      %p69 = scmp.eq.s32.totalorder %s20, 0
      %p70 = por %p68, %p69
      %s71 = ssub.s32 %s21, %s40
      %s72 = ssub.s32 %s22, %s36
      %s73 = sor.u32 %s71, %s72
      %p74 = scmp.eq.s32.totalorder %s73, 0
      %s76 = sadd.s32 %s75, 1
      %s77 = scalar_select %p74, %s75, %s76
      %p80 = pneg %p74
      %p81 = scmp.eq.s32.totalorder %s14, 1
      %p82 = por %p80, %p81
      %p83 = scmp.ne.s32.totalorder %s75, %s78
      %p84 = scmp.eq.s32.totalorder %s14, 0
      %p85 = por %p83, %p84
      %p86 = scmp.ne.s32.totalorder %s75, %s78
      %p87 = scmp.eq.s32.totalorder %s19, 1
      %p88 = por %p86, %p87
      %p89 = scmp.ne.s32.totalorder %s78, %s79
      %p90 = scmp.eq.s32.totalorder %s19, 0
      %p91 = por %p89, %p90
      %p92 = scmp.ne.s32.totalorder %s78, %s79
      %p93 = scmp.eq.s32.totalorder %s20, 1
      %p94 = por %p92, %p93
      %p96 = scmp.ne.s32.totalorder %s79, %s95
      %p97 = scmp.eq.s32.totalorder %s20, 0
      %p98 = por %p96, %p97
      %s99 = ssub.s32 %s21, %s40
      %s100 = ssub.s32 %s22, %s36
      %s101 = sor.u32 %s99, %s100
      %s102 = ssub.s32 %s23, %s32
      %s103 = sor.u32 %s101, %s102
      %p104 = scmp.eq.s32.totalorder %s103, 0
      %s106 = sadd.s32 %s105, 1
      %s107 = scalar_select %p104, %s105, %s106
      %p110 = pneg %p104
      %p111 = scmp.eq.s32.totalorder %s14, 1
      %p112 = por %p110, %p111
      %p113 = scmp.ne.s32.totalorder %s105, %s108
      %p114 = scmp.eq.s32.totalorder %s14, 0
      %p115 = por %p113, %p114
      %p116 = scmp.ne.s32.totalorder %s105, %s108
      %p117 = scmp.eq.s32.totalorder %s19, 1
      %p118 = por %p116, %p117
      %p119 = scmp.ne.s32.totalorder %s108, %s109
      %p120 = scmp.eq.s32.totalorder %s19, 0
      %p121 = por %p119, %p120
      %p122 = scmp.ne.s32.totalorder %s108, %s109
      %p123 = scmp.eq.s32.totalorder %s20, 1
      %p124 = por %p122, %p123
      %p126 = scmp.ne.s32.totalorder %s109, %s125
      %p127 = scmp.eq.s32.totalorder %s20, 0
      %p128 = por %p126, %p127
      %p129 = scmp.le.s32.totalorder 1, %s14
      %p130 = scmp.lt.s32.totalorder %s14, 3
      %p131 = pnand %p129, %p130
      %p132 = pneg %p131
      // Predicated region
      $region9: #{tpu_custom_call.1} parent=5 // pred_check
        _
      $region10: #{tpu_custom_call.1} parent=5 // pred_check_branch
        %134 = sbr.rel (%p131) target = $region12
      $region11: #{tpu_custom_call.1} parent=5 // pred_region
        %s135 = ssub.s32 %s14, 1
      $region12: #{tpu_custom_call.1} parent=5 // pred_fallthru
        _
      %p136 = scmp.lt.s32.totalorder %s14, 2
      // Predicated region
      $region13: #{tpu_custom_call.1} parent=5 // pred_check
        %p137 = pneg %p136
      $region14: #{tpu_custom_call.1} parent=5 // pred_check_branch
        %139 = sbr.rel (%p137) target = $region16
      $region15: #{tpu_custom_call.1} parent=5 // pred_region
        // Predicated region
        $region17: #{tpu_custom_call.1} parent=15 // pred_check
          %p140 = pneg %p57
        $region18: #{tpu_custom_call.1} parent=15 // pred_check_branch
          %142 = sbr.rel (%p140) target = $region20
        $region19: #{tpu_custom_call.1} parent=15 // pred_region
          %s143 = sand.u32 %s47, 1
          %s144 = scalar_lea.sflag [#allocation3], %s143
          %s145 = sand.u32 %s47, 1
          %s146 = smul.addr %s145, 8
          %s147 = scalar_lea.vmem [#allocation2], %s146
          %s148 = smul.u32 2, %s23
          %150 = vsyncadd %s144, 0
          %s151 = smul.addr %s22, 2
          %s152 = sadd.s32 %s148, %s151
          %s153 = smul.addr %s21, 2
          %s154 = sadd.s32 %s152, %s153
          %s155 = smul.addr %s154, 4
          %s156 = scalar_lea.hbm %s0, %s155
          %s158 = sshll.u32 %s156, 4
          %s159 = int_to_ptr.hbm [resolvable:$true] %s158
          %s160 = sshll.u32 %s147, 4
          %s161 = int_to_ptr.vmem [resolvable:$true] %s160
          %163 = dma.hbm_to_vmem [thread:$0]  %s159, 128, %s161, %s144
        $region20: #{tpu_custom_call.1} parent=15 // pred_fallthru
          _
        // Predicated region
        $region21: #{tpu_custom_call.1} parent=15 // pred_check
          %p164 = pneg %p85
        $region22: #{tpu_custom_call.1} parent=15 // pred_check_branch
          %166 = sbr.rel (%p164) target = $region24
        $region23: #{tpu_custom_call.1} parent=15 // pred_region
          %p167 = scmp.lt.s32.totalorder %s21, 1
          %s168 = scalar_select %p167, %s21, 1
          %p169 = scmp.lt.s32.totalorder %s22, 0
          %s170 = scalar_select %p169, %s22, 0
          %s171 = smul.addr %s168, 2
          %s172 = sadd.s32 %s170, %s171
          %s173 = smul.addr %s172, 4
          %s174 = scalar_lea.vmem %s1, %s173
        $region24: #{tpu_custom_call.1} parent=15 // pred_fallthru
          _
      $region16: #{tpu_custom_call.1} parent=5 // pred_fallthru
        _
      %p175 = scmp.le.s32.totalorder 1, %s14
      %p176 = scmp.lt.s32.totalorder %s14, 3
      %p177 = pnand %p175, %p176
      %p178 = pneg %p177
      // Predicated region
      $region25: #{tpu_custom_call.1} parent=5 // pred_check
        _
      $region26: #{tpu_custom_call.1} parent=5 // pred_check_branch
        %180 = sbr.rel (%p177) target = $region28
      $region27: #{tpu_custom_call.1} parent=5 // pred_region
        %s181 = ssub.s32 %s14, 1
        %s182 = sand.u32 %s50, 1
        %s183 = scalar_lea.sflag [#allocation3], %s182
        %s184 = sand.u32 %s50, 1
        %s185 = smul.addr %s184, 8
        %s186 = scalar_lea.vmem [#allocation2], %s185
        // Predicated region
        $region29: #{tpu_custom_call.1} parent=27 // pred_check
          %p187 = pneg %p63
        $region30: #{tpu_custom_call.1} parent=27 // pred_check_branch
          %189 = sbr.rel (%p187) target = $region32
        $region31: #{tpu_custom_call.1} parent=27 // pred_region
          %191 = dma.done %s183, 128
        $region32: #{tpu_custom_call.1} parent=27 // pred_fallthru
          _
        %s192 = sand.u32 %s50, 1
        %s193 = scalar_lea.sflag [#allocation3], %s192
        %s194 = sand.u32 %s50, 1
        %s195 = smul.addr %s194, 8
        %s196 = scalar_lea.vmem [#allocation2], %s195
        %p197 = pneg %p63
        %p198 = pneg %p60
        %p199 = scmp.lt.s32.totalorder %s24, 1
        %s200 = scalar_select %p199, %s24, 1
        %p201 = scmp.lt.s32.totalorder %s25, 0
        %s202 = scalar_select %p201, %s25, 0
        %s203 = smul.addr %s200, 2
        %s204 = sadd.s32 %s202, %s203
        %s205 = smul.addr %s204, 4
        %s206 = scalar_lea.vmem %s1, %s205
        %p207 = pneg %p91
        %p208 = pneg %p88
        %p209 = pneg %p121
        %p210 = pneg %p118
        %s211 = sand.u32 %s108, 1
        %s212 = scalar_lea.sflag [#allocation4], %s211
        %s213 = sand.u32 %s108, 1
        %s214 = smul.addr %s213, 8
        %s215 = scalar_lea.vmem [#allocation5], %s214
        %s216 = smul.u32 2, %s26
        %p217 = scmp.lt.s32.totalorder %s24, 1
        %s218 = scalar_select %p217, %s24, 1
        %p219 = scmp.lt.s32.totalorder %s25, 0
        %s220 = scalar_select %p219, %s25, 0
        %s221 = smul.addr %s218, 2
        %s222 = sadd.s32 %s220, %s221
        %s223 = smul.addr %s222, 4
        %s224 = scalar_lea.vmem %s1, %s223
        %s225 = smul.u32 2, %s26
        %v226 = vld [vmem:[%s224] sm:$0xf]
        %s227 = scalar_lea.vmem %s224, 4
        %v228 = vld [vmem:[%s227] sm:$0xf]
        %v229 = vld [vmem:[%s186] sm:$0xff]
        %231 = vset.pattern.permute.xlu0 0
        %232 = vperm.xlu0 %231, %v226
        %v233 = vpop.permute.xlu0 %232
        %v235 = vunpack.c.l.s4 839922192
        %v236 = vunpack.c.0.s8 %v235
        %v237 = vperm.slane %v233, %v236
        %v239 = vmul.f32 %v229, %v237
        %241 = vset.pattern.permute.xlu0 0
        %242 = vperm.xlu0 %241, %v228
        %v243 = vpop.permute.xlu0 %242
        %v245 = vunpack.c.l.s4 839922192
        %v246 = vunpack.c.0.s8 %v245
        %v247 = vperm.slane %v243, %v246
        %v249 = vadd.f32 %v239, %v247
        %250 = vst [vmem:[%s215] sm:$0xff] %v249
        %s251 = sand.u32 %s108, 1
        %s252 = scalar_lea.sflag [#allocation4], %s251
        %s253 = sand.u32 %s108, 1
        %s254 = smul.addr %s253, 8
        %s255 = scalar_lea.vmem [#allocation5], %s254
        // Predicated region
        $region33: #{tpu_custom_call.1} parent=27 // pred_check
          %p256 = pneg %p118
        $region34: #{tpu_custom_call.1} parent=27 // pred_check_branch
          %258 = sbr.rel (%p256) target = $region36
        $region35: #{tpu_custom_call.1} parent=27 // pred_region
          %s259 = smul.u32 2, %s26
          %261 = vsyncadd %s252, 0
          %s262 = smul.addr %s25, 2
          %s263 = sadd.s32 %s259, %s262
          %s264 = smul.addr %s24, 2
          %s265 = sadd.s32 %s263, %s264
          %s266 = smul.addr %s265, 4
          %s267 = scalar_lea.hbm %s2, %s266
          %s269 = sshll.u32 %s255, 4
          %s270 = int_to_ptr.vmem [resolvable:$true] %s269
          %s271 = sshll.u32 %s267, 4
          %s272 = int_to_ptr.hbm [resolvable:$true] %s271
          %274 = dma.vmem_to_hbm [thread:$0]  %s270, 128, %s272, %s252
        $region36: #{tpu_custom_call.1} parent=27 // pred_fallthru
          _
      $region28: #{tpu_custom_call.1} parent=5 // pred_fallthru
        _
      %p275 = scmp.le.s32.totalorder 2, %s14
      // Predicated region
      $region37: #{tpu_custom_call.1} parent=5 // pred_check
        %p276 = pneg %p275
      $region38: #{tpu_custom_call.1} parent=5 // pred_check_branch
        %278 = sbr.rel (%p276) target = $region40
      $region39: #{tpu_custom_call.1} parent=5 // pred_region
        %s279 = ssub.s32 %s14, 2
        // Predicated region
        $region41: #{tpu_custom_call.1} parent=39 // pred_check
          %p280 = pneg %p124
        $region42: #{tpu_custom_call.1} parent=39 // pred_check_branch
          %282 = sbr.rel (%p280) target = $region44
        $region43: #{tpu_custom_call.1} parent=39 // pred_region
          %s283 = sand.u32 %s109, 1
          %s284 = scalar_lea.sflag [#allocation4], %s283
          %s285 = sand.u32 %s109, 1
          %s286 = smul.addr %s285, 8
          %s287 = scalar_lea.vmem [#allocation5], %s286
          %289 = dma.done %s284, 128
        $region44: #{tpu_custom_call.1} parent=39 // pred_fallthru
          _
      $region40: #{tpu_custom_call.1} parent=5 // pred_fallthru
        _
    $region6: #{tpu_custom_call.1} parent=1 // loop_footer
      %s18 = sadd.s32 1, %s14
    $region7: #{tpu_custom_call.1} parent=1 // loop_footer_branch
      %13 = sbr.rel target = $region3
    $region8: #{tpu_custom_call.1} parent=1 // loop_exit
      _
    %290 = vsyncpa [#allocation3], 1
    %s291 = scalar_lea.sflag [#allocation3], 1
    %292 = vsyncpa %s291, 1
    %293 = vsyncpa [#allocation4], 1
    %s294 = scalar_lea.sflag [#allocation4], 1
    %295 = vsyncpa %s294, 1

</llo_original>
